<compile_context>
chip_gen: v6e
topology: v6e:2x2x1
jax: 0.10.0
libtpu: 0.0.40
codegen_flags: <defaults>
</compile_context>

<pallas_src>
import functools

import jax
import jax.numpy as jnp
from jax.experimental import pallas as pl
from jax.experimental.pallas import tpu as pltpu

LN_EPS = 1e-5          # torch.nn.LayerNorm default
LEAKY_SLOPE = 0.01     # torch.nn.LeakyReLU default
HIDDEN_DIM = 32
LATENT_DIM = 16
MAX_BATCH_TILE = 4096  # multiple of 8; overhead-bound kernel wants big tiles


def _ln_lrelu_two_groups(y, g, beta, half):
    """Independent LayerNorm over each `half`-wide lane group, then LeakyReLU."""
    def ln(z):
        m = jnp.mean(z, axis=-1, keepdims=True)
        d = z - m                                    # two-pass LN (no cancellation)
        v = jnp.mean(d * d, axis=-1, keepdims=True)
        return d * jax.lax.rsqrt(v + LN_EPS)

    y = jnp.concatenate([ln(y[:, :half]), ln(y[:, half:])], axis=-1)
    y = y * g + beta
    return jnp.where(y >= 0, y, LEAKY_SLOPE * y)


def fused_mlp_kernel(x_ref,
                     w1_ref, b1_ref, g1_ref, be1_ref,
                     w2_ref, b2_ref, g2_ref, be2_ref,
                     w3_ref, b3_ref, g3_ref, be3_ref,
                     o_ref, *, halves):
    """One grid step = one batch tile: both nets' 3-block MLP, lane-fused."""
    h = x_ref[...].astype(jnp.float32)

    h = jnp.dot(h, w1_ref[...], preferred_element_type=jnp.float32) + b1_ref[...]
    h = _ln_lrelu_two_groups(h, g1_ref[...], be1_ref[...], halves[0])

    h = jnp.dot(h, w2_ref[...], preferred_element_type=jnp.float32) + b2_ref[...]
    h = _ln_lrelu_two_groups(h, g2_ref[...], be2_ref[...], halves[1])

    h = jnp.dot(h, w3_ref[...], preferred_element_type=jnp.float32) + b3_ref[...]
    h = _ln_lrelu_two_groups(h, g3_ref[...], be3_ref[...], halves[2])

    o_ref[...] = h.astype(o_ref.dtype)


def _block_diag(a, b):
    ra, ca = a.shape
    rb, cb = b.shape
    top = jnp.concatenate([a, jnp.zeros((ra, cb), a.dtype)], axis=1)
    bot = jnp.concatenate([jnp.zeros((rb, ca), b.dtype), b], axis=1)
    return jnp.concatenate([top, bot], axis=0)


def _fuse_params(policy_params, value_params):
    """Lane-fuse (policy, value) params: concat layer 1, block-diag layers 2+."""
    fused = []
    for layer_idx, (pp, vp) in enumerate(zip(policy_params, value_params)):
        wp, bp, gp, bep = pp
        wv, bv, gv, bev = vp
        if layer_idx == 0:
            w = jnp.concatenate([wp, wv], axis=1)          # (feat, 2*out)
        else:
            w = _block_diag(wp, wv)                        # (2*in, 2*out)
        fused.append(w)
        for a, b in ((bp, bv), (gp, gv), (bep, bev)):
            fused.append(jnp.concatenate([a, b]).reshape(1, -1))  # (1, 2*out)
    return fused


@jax.jit
def custom_network_forward(features, policy_params, value_params):
    """Returns (actor_latent, critic_latent), matching CustomNetwork.forward."""
    batch, feat = features.shape
    halves = tuple(pp[0].shape[1] for pp in policy_params)   # (32, 32, 16)
    out_dim = 2 * halves[-1]                                 # 32 lanes, lane-dense
    fused = _fuse_params(policy_params, value_params)

    # Batch tiling: large tiles (the kernel is overhead/DMA-bound), padded so a
    # ragged batch never collapses into one block that could bust scoped VMEM.
    rounded = ((batch + 7) // 8) * 8
    vmem_cap = max(8, ((4 << 20) // (max(feat, out_dim) * 4)) // 8 * 8)
    tile_b = min(rounded, MAX_BATCH_TILE, vmem_cap)
    padded = ((batch + tile_b - 1) // tile_b) * tile_b
    x = features if padded == batch else jnp.pad(
        features, ((0, padded - batch), (0, 0)))
    n_btiles = padded // tile_b

    def full_spec(arr):
        # Tiny (<20 KB) fused weight set: fully resident in VMEM for all tiles.
        return pl.BlockSpec(arr.shape, lambda i: (0, 0))

    in_specs = [pl.BlockSpec((tile_b, feat), lambda i: (i, 0))]
    in_specs += [full_spec(a) for a in fused]

    out = pl.pallas_call(
        functools.partial(fused_mlp_kernel, halves=halves),
        out_shape=jax.ShapeDtypeStruct((padded, out_dim), features.dtype),
        grid=(n_btiles,),
        in_specs=in_specs,
        out_specs=pl.BlockSpec((tile_b, out_dim), lambda i: (i, 0)),
        compiler_params=pltpu.CompilerParams(
            dimension_semantics=("parallel",)),
    )(x, *fused)

    latent = halves[-1]
    return out[:batch, :latent], out[:batch, latent:2 * latent]


def init_block(key, in_f, out_f):
    """Deterministic params mimicking PyTorch defaults (uniform +-1/sqrt(in))."""
    kw, kb = jax.random.split(key)
    bound = 1.0 / jnp.sqrt(jnp.float32(in_f))
    w = jax.random.uniform(kw, (in_f, out_f), jnp.float32, -bound, bound)
    b = jax.random.uniform(kb, (out_f,), jnp.float32, -bound, bound)
    gamma = jnp.ones((out_f,), jnp.float32)
    beta = jnp.zeros((out_f,), jnp.float32)
    return (w, b, gamma, beta)


def init_net(key, feature_dim):
    k1, k2, k3 = jax.random.split(key, 3)
    return [init_block(k1, feature_dim, HIDDEN_DIM),
            init_block(k2, HIDDEN_DIM, HIDDEN_DIM),
            init_block(k3, HIDDEN_DIM, LATENT_DIM)]


if __name__ == "__main__":
    feature_dim = 32
    batch = 8

    key = jax.random.PRNGKey(0)
    kx, kp, kv = jax.random.split(key, 3)

    features = jax.random.normal(kx, (batch, feature_dim), jnp.float32)
    policy_params = init_net(kp, feature_dim)
    value_params = init_net(kv, feature_dim)

    actor, critic = custom_network_forward(features, policy_params, value_params)
    jax.block_until_ready((actor, critic))

    assert actor.shape == (batch, LATENT_DIM)
    assert critic.shape == (batch, LATENT_DIM)

    # Pure-JAX reference of the same math (two-pass LayerNorm form).
    def ref_mlp(x, params):
        h = x
        for (w, b, g, be) in params:
            y = h @ w + b
            m = y.mean(-1, keepdims=True)
            v = ((y - m) ** 2).mean(-1, keepdims=True)
            y = (y - m) / jnp.sqrt(v + LN_EPS) * g + be
            h = jnp.where(y >= 0, y, LEAKY_SLOPE * y)
        return h

    ref_a = ref_mlp(features, policy_params)
    ref_c = ref_mlp(features, value_params)
    assert jnp.allclose(actor, ref_a, atol=1e-4, rtol=1e-4)
    assert jnp.allclose(critic, ref_c, atol=1e-4, rtol=1e-4)

    print("KERNEL_OK")
</pallas_src>

<mosaic_0001>
module attributes {stable_mosaic.version = 11 : i64} {
  func.func @fused_mlp_kernel(%arg0: i32, %arg1: memref<8x32xf32, #tpu.memory_space<vmem>>, %arg2: memref<32x64xf32, #tpu.memory_space<vmem>>, %arg3: memref<1x64xf32, #tpu.memory_space<vmem>>, %arg4: memref<1x64xf32, #tpu.memory_space<vmem>>, %arg5: memref<1x64xf32, #tpu.memory_space<vmem>>, %arg6: memref<64x64xf32, #tpu.memory_space<vmem>>, %arg7: memref<1x64xf32, #tpu.memory_space<vmem>>, %arg8: memref<1x64xf32, #tpu.memory_space<vmem>>, %arg9: memref<1x64xf32, #tpu.memory_space<vmem>>, %arg10: memref<64x32xf32, #tpu.memory_space<vmem>>, %arg11: memref<1x32xf32, #tpu.memory_space<vmem>>, %arg12: memref<1x32xf32, #tpu.memory_space<vmem>>, %arg13: memref<1x32xf32, #tpu.memory_space<vmem>>, %arg14: memref<8x32xf32, #tpu.memory_space<vmem>>) attributes {dimension_semantics = [#tpu.dimension_semantics<parallel>], iteration_bounds = array<i64: 1>, scalar_prefetch = 0 : i64, scratch_operands = 0 : i64, tpu.core_type = #tpu.core_type<tc>, window_params = [{transform_indices = @transform_0, window_bounds = array<i64: 8, 32>}, {pipeline_mode = #tpu.pipeline_mode<synchronous>, transform_indices = @transform_1, window_bounds = array<i64: 32, 64>}, {pipeline_mode = #tpu.pipeline_mode<synchronous>, transform_indices = @transform_2, window_bounds = array<i64: 1, 64>}, {pipeline_mode = #tpu.pipeline_mode<synchronous>, transform_indices = @transform_3, window_bounds = array<i64: 1, 64>}, {pipeline_mode = #tpu.pipeline_mode<synchronous>, transform_indices = @transform_4, window_bounds = array<i64: 1, 64>}, {pipeline_mode = #tpu.pipeline_mode<synchronous>, transform_indices = @transform_5, window_bounds = array<i64: 64, 64>}, {pipeline_mode = #tpu.pipeline_mode<synchronous>, transform_indices = @transform_6, window_bounds = array<i64: 1, 64>}, {pipeline_mode = #tpu.pipeline_mode<synchronous>, transform_indices = @transform_7, window_bounds = array<i64: 1, 64>}, {pipeline_mode = #tpu.pipeline_mode<synchronous>, transform_indices = @transform_8, window_bounds = array<i64: 1, 64>}, {pipeline_mode = #tpu.pipeline_mode<synchronous>, transform_indices = @transform_9, window_bounds = array<i64: 64, 32>}, {pipeline_mode = #tpu.pipeline_mode<synchronous>, transform_indices = @transform_10, window_bounds = array<i64: 1, 32>}, {pipeline_mode = #tpu.pipeline_mode<synchronous>, transform_indices = @transform_11, window_bounds = array<i64: 1, 32>}, {pipeline_mode = #tpu.pipeline_mode<synchronous>, transform_indices = @transform_12, window_bounds = array<i64: 1, 32>}, {transform_indices = @transform_13, window_bounds = array<i64: 8, 32>}]} {
    %c0 = arith.constant 0 : index
    %c0_0 = arith.constant 0 : index
    %0 = vector.load %arg1[%c0, %c0_0] : memref<8x32xf32, #tpu.memory_space<vmem>>, vector<8x32xf32>
    %c0_1 = arith.constant 0 : index
    %c0_2 = arith.constant 0 : index
    %1 = vector.load %arg2[%c0_1, %c0_2] : memref<32x64xf32, #tpu.memory_space<vmem>>, vector<32x64xf32>
    %cst = arith.constant dense<0.000000e+00> : vector<8x64xf32>
    %2 = tpu.matmul %0, %1, %cst {dimension_numbers = #tpu.dot_dimension_numbers<[1], [0], [0], [1], [0, 0, 1, 1], [], []>} : vector<8x32xf32>, vector<32x64xf32>, vector<8x64xf32> -> vector<8x64xf32>
    %c0_3 = arith.constant 0 : index
    %c0_4 = arith.constant 0 : index
    %3 = vector.load %arg3[%c0_3, %c0_4] : memref<1x64xf32, #tpu.memory_space<vmem>>, vector<1x64xf32>
    %4 = vector.broadcast %3 : vector<1x64xf32> to vector<8x64xf32>
    %5 = arith.addf %2, %4 : vector<8x64xf32>
    %c0_5 = arith.constant 0 : index
    %c0_6 = arith.constant 0 : index
    %6 = vector.load %arg4[%c0_5, %c0_6] : memref<1x64xf32, #tpu.memory_space<vmem>>, vector<1x64xf32>
    %c0_7 = arith.constant 0 : index
    %c0_8 = arith.constant 0 : index
    %7 = vector.load %arg5[%c0_7, %c0_8] : memref<1x64xf32, #tpu.memory_space<vmem>>, vector<1x64xf32>
    %8 = vector.extract_strided_slice %5 {offsets = [0, 0], sizes = [8, 32], strides = [1, 1]} : vector<8x64xf32> to vector<8x32xf32>
    %cst_9 = arith.constant dense<0.000000e+00> : vector<8xf32>
    %9 = vector.multi_reduction <add>, %8, %cst_9 [1] : vector<8x32xf32> to vector<8xf32>
    %10 = vector.shape_cast %9 : vector<8xf32> to vector<8x1xf32>
    %cst_10 = arith.constant 3.200000e+01 : f32
    %11 = vector.broadcast %cst_10 : f32 to vector<8x1xf32>
    %12 = arith.divf %10, %11 : vector<8x1xf32>
    %13 = vector.broadcast %12 : vector<8x1xf32> to vector<8x32xf32>
    %14 = arith.subf %8, %13 : vector<8x32xf32>
    %15 = arith.mulf %14, %14 : vector<8x32xf32>
    %cst_11 = arith.constant dense<0.000000e+00> : vector<8xf32>
    %16 = vector.multi_reduction <add>, %15, %cst_11 [1] : vector<8x32xf32> to vector<8xf32>
    %17 = vector.shape_cast %16 : vector<8xf32> to vector<8x1xf32>
    %cst_12 = arith.constant 3.200000e+01 : f32
    %18 = vector.broadcast %cst_12 : f32 to vector<8x1xf32>
    %19 = arith.divf %17, %18 : vector<8x1xf32>
    %cst_13 = arith.constant 9.99999974E-6 : f32
    %20 = vector.broadcast %cst_13 : f32 to vector<8x1xf32>
    %21 = arith.addf %19, %20 : vector<8x1xf32>
    %22 = math.rsqrt %21 : vector<8x1xf32>
    %23 = vector.broadcast %22 : vector<8x1xf32> to vector<8x32xf32>
    %24 = arith.mulf %14, %23 : vector<8x32xf32>
    %25 = vector.extract_strided_slice %5 {offsets = [0, 32], sizes = [8, 32], strides = [1, 1]} : vector<8x64xf32> to vector<8x32xf32>
    %cst_14 = arith.constant dense<0.000000e+00> : vector<8xf32>
    %26 = vector.multi_reduction <add>, %25, %cst_14 [1] : vector<8x32xf32> to vector<8xf32>
    %27 = vector.shape_cast %26 : vector<8xf32> to vector<8x1xf32>
    %cst_15 = arith.constant 3.200000e+01 : f32
    %28 = vector.broadcast %cst_15 : f32 to vector<8x1xf32>
    %29 = arith.divf %27, %28 : vector<8x1xf32>
    %30 = vector.broadcast %29 : vector<8x1xf32> to vector<8x32xf32>
    %31 = arith.subf %25, %30 : vector<8x32xf32>
    %32 = arith.mulf %31, %31 : vector<8x32xf32>
    %cst_16 = arith.constant dense<0.000000e+00> : vector<8xf32>
    %33 = vector.multi_reduction <add>, %32, %cst_16 [1] : vector<8x32xf32> to vector<8xf32>
    %34 = vector.shape_cast %33 : vector<8xf32> to vector<8x1xf32>
    %cst_17 = arith.constant 3.200000e+01 : f32
    %35 = vector.broadcast %cst_17 : f32 to vector<8x1xf32>
    %36 = arith.divf %34, %35 : vector<8x1xf32>
    %cst_18 = arith.constant 9.99999974E-6 : f32
    %37 = vector.broadcast %cst_18 : f32 to vector<8x1xf32>
    %38 = arith.addf %36, %37 : vector<8x1xf32>
    %39 = math.rsqrt %38 : vector<8x1xf32>
    %40 = vector.broadcast %39 : vector<8x1xf32> to vector<8x32xf32>
    %41 = arith.mulf %31, %40 : vector<8x32xf32>
    %42 = tpu.concatenate %24, %41 in 1 : vector<8x32xf32>, vector<8x32xf32> -> vector<8x64xf32>
    %43 = vector.broadcast %6 : vector<1x64xf32> to vector<8x64xf32>
    %44 = arith.mulf %42, %43 : vector<8x64xf32>
    %45 = vector.broadcast %7 : vector<1x64xf32> to vector<8x64xf32>
    %46 = arith.addf %44, %45 : vector<8x64xf32>
    %cst_19 = arith.constant 0.000000e+00 : f32
    %47 = vector.broadcast %cst_19 : f32 to vector<8x64xf32>
    %48 = arith.cmpf oge, %46, %47 : vector<8x64xf32>
    %cst_20 = arith.constant 0.00999999977 : f32
    %49 = vector.broadcast %cst_20 : f32 to vector<8x64xf32>
    %50 = arith.mulf %49, %46 : vector<8x64xf32>
    %51 = arith.select %48, %46, %50 : vector<8x64xi1>, vector<8x64xf32>
    %c0_21 = arith.constant 0 : index
    %c0_22 = arith.constant 0 : index
    %52 = vector.load %arg6[%c0_21, %c0_22] : memref<64x64xf32, #tpu.memory_space<vmem>>, vector<64x64xf32>
    %cst_23 = arith.constant dense<0.000000e+00> : vector<8x64xf32>
    %53 = tpu.matmul %51, %52, %cst_23 {dimension_numbers = #tpu.dot_dimension_numbers<[1], [0], [0], [1], [0, 0, 1, 1], [], []>} : vector<8x64xf32>, vector<64x64xf32>, vector<8x64xf32> -> vector<8x64xf32>
    %c0_24 = arith.constant 0 : index
    %c0_25 = arith.constant 0 : index
    %54 = vector.load %arg7[%c0_24, %c0_25] : memref<1x64xf32, #tpu.memory_space<vmem>>, vector<1x64xf32>
    %55 = vector.broadcast %54 : vector<1x64xf32> to vector<8x64xf32>
    %56 = arith.addf %53, %55 : vector<8x64xf32>
    %c0_26 = arith.constant 0 : index
    %c0_27 = arith.constant 0 : index
    %57 = vector.load %arg8[%c0_26, %c0_27] : memref<1x64xf32, #tpu.memory_space<vmem>>, vector<1x64xf32>
    %c0_28 = arith.constant 0 : index
    %c0_29 = arith.constant 0 : index
    %58 = vector.load %arg9[%c0_28, %c0_29] : memref<1x64xf32, #tpu.memory_space<vmem>>, vector<1x64xf32>
    %59 = vector.extract_strided_slice %56 {offsets = [0, 0], sizes = [8, 32], strides = [1, 1]} : vector<8x64xf32> to vector<8x32xf32>
    %cst_30 = arith.constant dense<0.000000e+00> : vector<8xf32>
    %60 = vector.multi_reduction <add>, %59, %cst_30 [1] : vector<8x32xf32> to vector<8xf32>
    %61 = vector.shape_cast %60 : vector<8xf32> to vector<8x1xf32>
    %cst_31 = arith.constant 3.200000e+01 : f32
    %62 = vector.broadcast %cst_31 : f32 to vector<8x1xf32>
    %63 = arith.divf %61, %62 : vector<8x1xf32>
    %64 = vector.broadcast %63 : vector<8x1xf32> to vector<8x32xf32>
    %65 = arith.subf %59, %64 : vector<8x32xf32>
    %66 = arith.mulf %65, %65 : vector<8x32xf32>
    %cst_32 = arith.constant dense<0.000000e+00> : vector<8xf32>
    %67 = vector.multi_reduction <add>, %66, %cst_32 [1] : vector<8x32xf32> to vector<8xf32>
    %68 = vector.shape_cast %67 : vector<8xf32> to vector<8x1xf32>
    %cst_33 = arith.constant 3.200000e+01 : f32
    %69 = vector.broadcast %cst_33 : f32 to vector<8x1xf32>
    %70 = arith.divf %68, %69 : vector<8x1xf32>
    %cst_34 = arith.constant 9.99999974E-6 : f32
    %71 = vector.broadcast %cst_34 : f32 to vector<8x1xf32>
    %72 = arith.addf %70, %71 : vector<8x1xf32>
    %73 = math.rsqrt %72 : vector<8x1xf32>
    %74 = vector.broadcast %73 : vector<8x1xf32> to vector<8x32xf32>
    %75 = arith.mulf %65, %74 : vector<8x32xf32>
    %76 = vector.extract_strided_slice %56 {offsets = [0, 32], sizes = [8, 32], strides = [1, 1]} : vector<8x64xf32> to vector<8x32xf32>
    %cst_35 = arith.constant dense<0.000000e+00> : vector<8xf32>
    %77 = vector.multi_reduction <add>, %76, %cst_35 [1] : vector<8x32xf32> to vector<8xf32>
    %78 = vector.shape_cast %77 : vector<8xf32> to vector<8x1xf32>
    %cst_36 = arith.constant 3.200000e+01 : f32
    %79 = vector.broadcast %cst_36 : f32 to vector<8x1xf32>
    %80 = arith.divf %78, %79 : vector<8x1xf32>
    %81 = vector.broadcast %80 : vector<8x1xf32> to vector<8x32xf32>
    %82 = arith.subf %76, %81 : vector<8x32xf32>
    %83 = arith.mulf %82, %82 : vector<8x32xf32>
    %cst_37 = arith.constant dense<0.000000e+00> : vector<8xf32>
    %84 = vector.multi_reduction <add>, %83, %cst_37 [1] : vector<8x32xf32> to vector<8xf32>
    %85 = vector.shape_cast %84 : vector<8xf32> to vector<8x1xf32>
    %cst_38 = arith.constant 3.200000e+01 : f32
    %86 = vector.broadcast %cst_38 : f32 to vector<8x1xf32>
    %87 = arith.divf %85, %86 : vector<8x1xf32>
    %cst_39 = arith.constant 9.99999974E-6 : f32
    %88 = vector.broadcast %cst_39 : f32 to vector<8x1xf32>
    %89 = arith.addf %87, %88 : vector<8x1xf32>
    %90 = math.rsqrt %89 : vector<8x1xf32>
    %91 = vector.broadcast %90 : vector<8x1xf32> to vector<8x32xf32>
    %92 = arith.mulf %82, %91 : vector<8x32xf32>
    %93 = tpu.concatenate %75, %92 in 1 : vector<8x32xf32>, vector<8x32xf32> -> vector<8x64xf32>
    %94 = vector.broadcast %57 : vector<1x64xf32> to vector<8x64xf32>
    %95 = arith.mulf %93, %94 : vector<8x64xf32>
    %96 = vector.broadcast %58 : vector<1x64xf32> to vector<8x64xf32>
    %97 = arith.addf %95, %96 : vector<8x64xf32>
    %cst_40 = arith.constant 0.000000e+00 : f32
    %98 = vector.broadcast %cst_40 : f32 to vector<8x64xf32>
    %99 = arith.cmpf oge, %97, %98 : vector<8x64xf32>
    %cst_41 = arith.constant 0.00999999977 : f32
    %100 = vector.broadcast %cst_41 : f32 to vector<8x64xf32>
    %101 = arith.mulf %100, %97 : vector<8x64xf32>
    %102 = arith.select %99, %97, %101 : vector<8x64xi1>, vector<8x64xf32>
    %c0_42 = arith.constant 0 : index
    %c0_43 = arith.constant 0 : index
    %103 = vector.load %arg10[%c0_42, %c0_43] : memref<64x32xf32, #tpu.memory_space<vmem>>, vector<64x32xf32>
    %cst_44 = arith.constant dense<0.000000e+00> : vector<8x32xf32>
    %104 = tpu.matmul %102, %103, %cst_44 {dimension_numbers = #tpu.dot_dimension_numbers<[1], [0], [0], [1], [0, 0, 1, 1], [], []>} : vector<8x64xf32>, vector<64x32xf32>, vector<8x32xf32> -> vector<8x32xf32>
    %c0_45 = arith.constant 0 : index
    %c0_46 = arith.constant 0 : index
    %105 = vector.load %arg11[%c0_45, %c0_46] : memref<1x32xf32, #tpu.memory_space<vmem>>, vector<1x32xf32>
    %106 = vector.broadcast %105 : vector<1x32xf32> to vector<8x32xf32>
    %107 = arith.addf %104, %106 : vector<8x32xf32>
    %c0_47 = arith.constant 0 : index
    %c0_48 = arith.constant 0 : index
    %108 = vector.load %arg12[%c0_47, %c0_48] : memref<1x32xf32, #tpu.memory_space<vmem>>, vector<1x32xf32>
    %c0_49 = arith.constant 0 : index
    %c0_50 = arith.constant 0 : index
    %109 = vector.load %arg13[%c0_49, %c0_50] : memref<1x32xf32, #tpu.memory_space<vmem>>, vector<1x32xf32>
    %110 = vector.extract_strided_slice %107 {offsets = [0, 0], sizes = [8, 16], strides = [1, 1]} : vector<8x32xf32> to vector<8x16xf32>
    %cst_51 = arith.constant dense<0.000000e+00> : vector<8xf32>
    %111 = vector.multi_reduction <add>, %110, %cst_51 [1] : vector<8x16xf32> to vector<8xf32>
    %112 = vector.shape_cast %111 : vector<8xf32> to vector<8x1xf32>
    %cst_52 = arith.constant 1.600000e+01 : f32
    %113 = vector.broadcast %cst_52 : f32 to vector<8x1xf32>
    %114 = arith.divf %112, %113 : vector<8x1xf32>
    %115 = vector.broadcast %114 : vector<8x1xf32> to vector<8x16xf32>
    %116 = arith.subf %110, %115 : vector<8x16xf32>
    %117 = arith.mulf %116, %116 : vector<8x16xf32>
    %cst_53 = arith.constant dense<0.000000e+00> : vector<8xf32>
    %118 = vector.multi_reduction <add>, %117, %cst_53 [1] : vector<8x16xf32> to vector<8xf32>
    %119 = vector.shape_cast %118 : vector<8xf32> to vector<8x1xf32>
    %cst_54 = arith.constant 1.600000e+01 : f32
    %120 = vector.broadcast %cst_54 : f32 to vector<8x1xf32>
    %121 = arith.divf %119, %120 : vector<8x1xf32>
    %cst_55 = arith.constant 9.99999974E-6 : f32
    %122 = vector.broadcast %cst_55 : f32 to vector<8x1xf32>
    %123 = arith.addf %121, %122 : vector<8x1xf32>
    %124 = math.rsqrt %123 : vector<8x1xf32>
    %125 = vector.broadcast %124 : vector<8x1xf32> to vector<8x16xf32>
    %126 = arith.mulf %116, %125 : vector<8x16xf32>
    %127 = vector.extract_strided_slice %107 {offsets = [0, 16], sizes = [8, 16], strides = [1, 1]} : vector<8x32xf32> to vector<8x16xf32>
    %cst_56 = arith.constant dense<0.000000e+00> : vector<8xf32>
    %128 = vector.multi_reduction <add>, %127, %cst_56 [1] : vector<8x16xf32> to vector<8xf32>
    %129 = vector.shape_cast %128 : vector<8xf32> to vector<8x1xf32>
    %cst_57 = arith.constant 1.600000e+01 : f32
    %130 = vector.broadcast %cst_57 : f32 to vector<8x1xf32>
    %131 = arith.divf %129, %130 : vector<8x1xf32>
    %132 = vector.broadcast %131 : vector<8x1xf32> to vector<8x16xf32>
    %133 = arith.subf %127, %132 : vector<8x16xf32>
    %134 = arith.mulf %133, %133 : vector<8x16xf32>
    %cst_58 = arith.constant dense<0.000000e+00> : vector<8xf32>
    %135 = vector.multi_reduction <add>, %134, %cst_58 [1] : vector<8x16xf32> to vector<8xf32>
    %136 = vector.shape_cast %135 : vector<8xf32> to vector<8x1xf32>
    %cst_59 = arith.constant 1.600000e+01 : f32
    %137 = vector.broadcast %cst_59 : f32 to vector<8x1xf32>
    %138 = arith.divf %136, %137 : vector<8x1xf32>
    %cst_60 = arith.constant 9.99999974E-6 : f32
    %139 = vector.broadcast %cst_60 : f32 to vector<8x1xf32>
    %140 = arith.addf %138, %139 : vector<8x1xf32>
    %141 = math.rsqrt %140 : vector<8x1xf32>
    %142 = vector.broadcast %141 : vector<8x1xf32> to vector<8x16xf32>
    %143 = arith.mulf %133, %142 : vector<8x16xf32>
    %144 = tpu.concatenate %126, %143 in 1 : vector<8x16xf32>, vector<8x16xf32> -> vector<8x32xf32>
    %145 = vector.broadcast %108 : vector<1x32xf32> to vector<8x32xf32>
    %146 = arith.mulf %144, %145 : vector<8x32xf32>
    %147 = vector.broadcast %109 : vector<1x32xf32> to vector<8x32xf32>
    %148 = arith.addf %146, %147 : vector<8x32xf32>
    %cst_61 = arith.constant 0.000000e+00 : f32
    %149 = vector.broadcast %cst_61 : f32 to vector<8x32xf32>
    %150 = arith.cmpf oge, %148, %149 : vector<8x32xf32>
    %cst_62 = arith.constant 0.00999999977 : f32
    %151 = vector.broadcast %cst_62 : f32 to vector<8x32xf32>
    %152 = arith.mulf %151, %148 : vector<8x32xf32>
    %153 = arith.select %150, %148, %152 : vector<8x32xi1>, vector<8x32xf32>
    %c0_63 = arith.constant 0 : index
    %c0_64 = arith.constant 0 : index
    %154 = vector.load %arg14[%c0_63, %c0_64] : memref<8x32xf32, #tpu.memory_space<vmem>>, vector<8x32xf32>
    tpu.vector_store %arg14[%c0_63, %c0_64], %153 {strides = array<i32>} : memref<8x32xf32, #tpu.memory_space<vmem>>, vector<8x32xf32>,
    return
  }
  func.func @transform_0(%arg0: i32) -> (i32, i32) {
    %c0_i32 = arith.constant 0 : i32
    %c0_i32_0 = arith.constant 0 : i32
    return %arg0, %c0_i32 : i32, i32
  }
  func.func @transform_1(%arg0: i32) -> (i32, i32) {
    %c0_i32 = arith.constant 0 : i32
    %c0_i32_0 = arith.constant 0 : i32
    %c0_i32_1 = arith.constant 0 : i32
    return %c0_i32, %c0_i32_0 : i32, i32
  }
  func.func @transform_2(%arg0: i32) -> (i32, i32) {
    %c0_i32 = arith.constant 0 : i32
    %c0_i32_0 = arith.constant 0 : i32
    %c0_i32_1 = arith.constant 0 : i32
    return %c0_i32, %c0_i32_0 : i32, i32
  }
  func.func @transform_3(%arg0: i32) -> (i32, i32) {
    %c0_i32 = arith.constant 0 : i32
    %c0_i32_0 = arith.constant 0 : i32
    %c0_i32_1 = arith.constant 0 : i32
    return %c0_i32, %c0_i32_0 : i32, i32
  }
  func.func @transform_4(%arg0: i32) -> (i32, i32) {
    %c0_i32 = arith.constant 0 : i32
    %c0_i32_0 = arith.constant 0 : i32
    %c0_i32_1 = arith.constant 0 : i32
    return %c0_i32, %c0_i32_0 : i32, i32
  }
  func.func @transform_5(%arg0: i32) -> (i32, i32) {
    %c0_i32 = arith.constant 0 : i32
    %c0_i32_0 = arith.constant 0 : i32
    %c0_i32_1 = arith.constant 0 : i32
    return %c0_i32, %c0_i32_0 : i32, i32
  }
  func.func @transform_6(%arg0: i32) -> (i32, i32) {
    %c0_i32 = arith.constant 0 : i32
    %c0_i32_0 = arith.constant 0 : i32
    %c0_i32_1 = arith.constant 0 : i32
    return %c0_i32, %c0_i32_0 : i32, i32
  }
  func.func @transform_7(%arg0: i32) -> (i32, i32) {
    %c0_i32 = arith.constant 0 : i32
    %c0_i32_0 = arith.constant 0 : i32
    %c0_i32_1 = arith.constant 0 : i32
    return %c0_i32, %c0_i32_0 : i32, i32
  }
  func.func @transform_8(%arg0: i32) -> (i32, i32) {
    %c0_i32 = arith.constant 0 : i32
    %c0_i32_0 = arith.constant 0 : i32
    %c0_i32_1 = arith.constant 0 : i32
    return %c0_i32, %c0_i32_0 : i32, i32
  }
  func.func @transform_9(%arg0: i32) -> (i32, i32) {
    %c0_i32 = arith.constant 0 : i32
    %c0_i32_0 = arith.constant 0 : i32
    %c0_i32_1 = arith.constant 0 : i32
    return %c0_i32, %c0_i32_0 : i32, i32
  }
  func.func @transform_10(%arg0: i32) -> (i32, i32) {
    %c0_i32 = arith.constant 0 : i32
    %c0_i32_0 = arith.constant 0 : i32
    %c0_i32_1 = arith.constant 0 : i32
    return %c0_i32, %c0_i32_0 : i32, i32
  }
  func.func @transform_11(%arg0: i32) -> (i32, i32) {
    %c0_i32 = arith.constant 0 : i32
    %c0_i32_0 = arith.constant 0 : i32
    %c0_i32_1 = arith.constant 0 : i32
    return %c0_i32, %c0_i32_0 : i32, i32
  }
  func.func @transform_12(%arg0: i32) -> (i32, i32) {
    %c0_i32 = arith.constant 0 : i32
    %c0_i32_0 = arith.constant 0 : i32
    %c0_i32_1 = arith.constant 0 : i32
    return %c0_i32, %c0_i32_0 : i32, i32
  }
  func.func @transform_13(%arg0: i32) -> (i32, i32) {
    %c0_i32 = arith.constant 0 : i32
    %c0_i32_0 = arith.constant 0 : i32
    return %arg0, %c0_i32 : i32, i32
  }
}

</mosaic_0001>

<llo_original>
// kernel: custom_network_forward.1
$region0: #{custom_network_forward.1}
  #allocation0 [shape = 'u32[]', space=smem, size = 0x4, offset = 0x4, fixed_abs, tag = 'smem constant byte address 0x4 - core index']
  #allocation1 [shape = 'u32[144,128]{1,0:T(1,128)}', space=vmem, size = 0x12000, scoped, tag = 'internal scratch']
  %s0 = inlined_call_operand.vmem [shape: f32[8,32], index: 0, kind: input, shape index: {}]
  %s1 = inlined_call_operand.vmem [shape: f32[32,64], index: 1, kind: input, shape index: {}]
  %s2 = inlined_call_operand.vmem [shape: f32[1,64], index: 2, kind: input, shape index: {}]
  %s3 = inlined_call_operand.vmem [shape: f32[1,64], index: 3, kind: input, shape index: {}]
  %s4 = inlined_call_operand.vmem [shape: f32[1,64], index: 4, kind: input, shape index: {}]
  %s5 = inlined_call_operand.vmem [shape: f32[64,64], index: 5, kind: input, shape index: {}]
  %s6 = inlined_call_operand.vmem [shape: f32[1,64], index: 6, kind: input, shape index: {}]
  %s7 = inlined_call_operand.vmem [shape: f32[1,64], index: 7, kind: input, shape index: {}]
  %s8 = inlined_call_operand.vmem [shape: f32[1,64], index: 8, kind: input, shape index: {}]
  %s9 = inlined_call_operand.vmem [shape: f32[64,32], index: 9, kind: input, shape index: {}]
  %s10 = inlined_call_operand.vmem [shape: f32[1,32], index: 10, kind: input, shape index: {}]
  %s11 = inlined_call_operand.vmem [shape: f32[1,32], index: 11, kind: input, shape index: {}]
  %s12 = inlined_call_operand.vmem [shape: f32[1,32], index: 12, kind: input, shape index: {}]
  %s13 = inlined_call_operand.vmem [shape: f32[8,32], index: 13, kind: output, shape index: {}]
  %s14 = sld [smem:[#allocation0]]
  $region62: #{custom_network_forward.1} parent=0
    _
  %s16 = ssub.s32 1, %s14
  %s17 = scalar_select 0, %s16, %s14
  // Predicated region
  $region2: #{custom_network_forward.1} parent=0 // pred_check
    _
  $region3: #{custom_network_forward.1} parent=0 // pred_check_branch
    %19 = sbr.rel (0) target = $region5
  $region4: #{custom_network_forward.1} parent=0 // pred_region
    _
  $region5: #{custom_network_forward.1} parent=0 // pred_fallthru
    _
  // Predicated region
  $region6: #{custom_network_forward.1} parent=0 // pred_check
    _
  $region7: #{custom_network_forward.1} parent=0 // pred_check_branch
    %21 = sbr.rel (0) target = $region9
  $region8: #{custom_network_forward.1} parent=0 // pred_region
    _
  $region9: #{custom_network_forward.1} parent=0 // pred_fallthru
    _
  // Predicated region
  $region10: #{custom_network_forward.1} parent=0 // pred_check
    _
  $region11: #{custom_network_forward.1} parent=0 // pred_check_branch
    %23 = sbr.rel (0) target = $region13
  $region12: #{custom_network_forward.1} parent=0 // pred_region
    _
  $region13: #{custom_network_forward.1} parent=0 // pred_fallthru
    _
  // Predicated region
  $region14: #{custom_network_forward.1} parent=0 // pred_check
    _
  $region15: #{custom_network_forward.1} parent=0 // pred_check_branch
    %25 = sbr.rel (0) target = $region17
  $region16: #{custom_network_forward.1} parent=0 // pred_region
    _
  $region17: #{custom_network_forward.1} parent=0 // pred_fallthru
    _
  // Predicated region
  $region18: #{custom_network_forward.1} parent=0 // pred_check
    _
  $region19: #{custom_network_forward.1} parent=0 // pred_check_branch
    %27 = sbr.rel (0) target = $region21
  $region20: #{custom_network_forward.1} parent=0 // pred_region
    _
  $region21: #{custom_network_forward.1} parent=0 // pred_fallthru
    _
  // Predicated region
  $region22: #{custom_network_forward.1} parent=0 // pred_check
    _
  $region23: #{custom_network_forward.1} parent=0 // pred_check_branch
    %29 = sbr.rel (0) target = $region25
  $region24: #{custom_network_forward.1} parent=0 // pred_region
    _
  $region25: #{custom_network_forward.1} parent=0 // pred_fallthru
    _
  // Predicated region
  $region26: #{custom_network_forward.1} parent=0 // pred_check
    _
  $region27: #{custom_network_forward.1} parent=0 // pred_check_branch
    %31 = sbr.rel (0) target = $region29
  $region28: #{custom_network_forward.1} parent=0 // pred_region
    _
  $region29: #{custom_network_forward.1} parent=0 // pred_fallthru
    _
  // Predicated region
  $region30: #{custom_network_forward.1} parent=0 // pred_check
    _
  $region31: #{custom_network_forward.1} parent=0 // pred_check_branch
    %33 = sbr.rel (0) target = $region33
  $region32: #{custom_network_forward.1} parent=0 // pred_region
    _
  $region33: #{custom_network_forward.1} parent=0 // pred_fallthru
    _
  // Predicated region
  $region34: #{custom_network_forward.1} parent=0 // pred_check
    _
  $region35: #{custom_network_forward.1} parent=0 // pred_check_branch
    %35 = sbr.rel (0) target = $region37
  $region36: #{custom_network_forward.1} parent=0 // pred_region
    _
  $region37: #{custom_network_forward.1} parent=0 // pred_fallthru
    _
  // Predicated region
  $region38: #{custom_network_forward.1} parent=0 // pred_check
    _
  $region39: #{custom_network_forward.1} parent=0 // pred_check_branch
    %37 = sbr.rel (0) target = $region41
  $region40: #{custom_network_forward.1} parent=0 // pred_region
    _
  $region41: #{custom_network_forward.1} parent=0 // pred_fallthru
    _
  // Predicated region
  $region42: #{custom_network_forward.1} parent=0 // pred_check
    _
  $region43: #{custom_network_forward.1} parent=0 // pred_check_branch
    %39 = sbr.rel (0) target = $region45
  $region44: #{custom_network_forward.1} parent=0 // pred_region
    _
  $region45: #{custom_network_forward.1} parent=0 // pred_fallthru
    _
  // Predicated region
  $region46: #{custom_network_forward.1} parent=0 // pred_check
    _
  $region47: #{custom_network_forward.1} parent=0 // pred_check_branch
    %41 = sbr.rel (0) target = $region49
  $region48: #{custom_network_forward.1} parent=0 // pred_region
    _
  $region49: #{custom_network_forward.1} parent=0 // pred_fallthru
    _
  // Predicated region
  $region50: #{custom_network_forward.1} parent=0 // pred_check
    _
  $region51: #{custom_network_forward.1} parent=0 // pred_check_branch
    %43 = sbr.rel (0) target = $region53
  $region52: #{custom_network_forward.1} parent=0 // pred_region
    _
  $region53: #{custom_network_forward.1} parent=0 // pred_fallthru
    _
  %v44 = vld [vmem:[%s0] sm:$0xff]
  %v45 = vld [vmem:[%s1] sm:$0xff]
  %v46 = vld [vmem:[%s1 + $0x8] sm:$0xff]
  %v47 = vld [vmem:[%s1 + $0x10] sm:$0xff]
  %v48 = vld [vmem:[%s1 + $0x18] sm:$0xff]
  %v49 = vld [vmem:[%s2] sm:$0x1]
  %v51 = vlaneseq
  %v52 = vshrl.u32 %v51, 7
  %v53 = vsub.s32 0, %v52
  %v54 = vrot.slane %v49, %v53
  %vm56 = vcmask 261120
  %v58 = vsel %vm56, %v44, 0
  %60 = vmatprep.subr.mxu0 0.0
  %61 = vmatpush1.msra.mxu0 0.0
  %62 = vmatprep.subr.mxu0 0.0
  %63 = vmatpush1.msra.mxu0 0.0
  %64 = vmatprep.subr.mxu0 0.0
  %65 = vmatpush1.msra.mxu0 0.0
  %66 = vmatprep.subr.mxu0 0.0
  %67 = vmatpush1.msra.mxu0 0.0
  %68 = vmatprep.subr.mxu0 0.0
  %69 = vmatpush1.msra.mxu0 0.0
  %70 = vmatprep.subr.mxu0 0.0
  %71 = vmatpush1.msra.mxu0 0.0
  %72 = vmatprep.subr.mxu0 0.0
  %73 = vmatpush1.msra.mxu0 0.0
  %74 = vmatprep.subr.mxu0 0.0
  %75 = vmatpush1.msra.mxu0 0.0
  %76 = vmatprep.subr.mxu0 0.0
  %77 = vmatpush1.msra.mxu0 0.0
  %78 = vmatprep.subr.mxu0 0.0
  %79 = vmatpush1.msra.mxu0 0.0
  %80 = vmatprep.subr.mxu0 0.0
  %81 = vmatpush1.msra.mxu0 0.0
  %82 = vmatprep.subr.mxu0 0.0
  %83 = vmatpush1.msra.mxu0 0.0
  %84 = vmatprep.subr.mxu0 0.0
  %85 = vmatpush1.msra.mxu0 %v48
  %86 = vmatprep.subr.mxu0 0.0
  %87 = vmatpush1.msra.mxu0 %v47
  %88 = vmatprep.subr.mxu0 0.0
  %89 = vmatpush1.msra.mxu0 %v46
  %90 = vmatprep.subr.mxu0 0.0
  %91 = vmatpush1.msra.mxu0 %v45
  %92 = vmatprep.subr.mxu0 0.0
  %93 = vmatpush2.msra.mxu0 0.0
  %94 = vmatprep.subr.mxu0 0.0
  %95 = vmatpush2.msra.mxu0 0.0
  %96 = vmatprep.subr.mxu0 0.0
  %97 = vmatpush2.msra.mxu0 0.0
  %98 = vmatprep.subr.mxu0 0.0
  %99 = vmatpush2.msra.mxu0 0.0
  %100 = vmatprep.subr.mxu0 0.0
  %101 = vmatpush2.msra.mxu0 0.0
  %102 = vmatprep.subr.mxu0 0.0
  %103 = vmatpush2.msra.mxu0 0.0
  %104 = vmatprep.subr.mxu0 0.0
  %105 = vmatpush2.msra.mxu0 0.0
  %106 = vmatprep.subr.mxu0 0.0
  %107 = vmatpush2.msra.mxu0 0.0
  %108 = vmatprep.subr.mxu0 0.0
  %109 = vmatpush2.msra.mxu0 0.0
  %110 = vmatprep.subr.mxu0 0.0
  %111 = vmatpush2.msra.mxu0 0.0
  %112 = vmatprep.subr.mxu0 0.0
  %113 = vmatpush2.msra.mxu0 0.0
  %114 = vmatprep.subr.mxu0 0.0
  %115 = vmatpush2.msra.mxu0 0.0
  %116 = vmatprep.subr.mxu0 0.0
  %117 = vmatpush2.msra.mxu0 0.0
  %118 = vmatprep.subr.mxu0 0.0
  %119 = vmatpush2.msra.mxu0 0.0
  %120 = vmatprep.subr.mxu0 0.0
  %121 = vmatpush2.msra.mxu0 0.0
  %122 = vmatprep.subr.mxu0 0.0
  %123 = vmatpush2.msra.mxu0 0.0
  %124 = vmatprep.mubr.f32.mxu0 0.0
  %125 = vmatmul.mubr.f32.gmra.mxu0 %v58
  %v126 = vpop.f32.mrf.mxu0
  %v127 = vadd.f32 %v54, %v126
  %v128 = vpop.f32.mrf.mxu0
  %129 = vdwg.mxu0
  %v130 = vld [vmem:[%s3] sm:$0x1]
  %v131 = vld [vmem:[%s4] sm:$0x1]
  %v132 = vsel %vm56, %v127, 0.0
  %133 = vadd.xlane.f32.xlu0 %v132
  %v134 = vpop.xlane.xlu0 %133
  %v135 = vrcp.pop 32.0
  %v136 = vmul.f32 %v134, %v135
  %v137 = vsub.f32 %v127, %v136
  %v138 = vmul.f32 %v137, %v137
  %v139 = vsel %vm56, %v138, 0.0
  %140 = vadd.xlane.f32.xlu0 %v139
  %v141 = vpop.xlane.xlu0 %140
  %v142 = vmul.f32 %v141, %v135
  %v143 = vadd.f32 %v142, 1e-05
  %v144 = vrsqrt.pop %v143
  %v145 = vmul.f32 %v137, %v144
  %147 = vrot.lane.b32.xlu0 %v127, 96
  %v148 = vpop.permute.xlu0 %147
  %v150 = vsel %vm56, %v148, 0.0
  %151 = vadd.xlane.f32.xlu0 %v150
  %v152 = vpop.xlane.xlu0 %151
  %v153 = vmul.f32 %v152, %v135
  %v154 = vsub.f32 %v127, %v153
  %v155 = vmul.f32 %v154, %v154
  %157 = vrot.lane.b32.xlu0 %v155, 96
  %v158 = vpop.permute.xlu0 %157
  %v160 = vsel %vm56, %v158, 0.0
  %161 = vadd.xlane.f32.xlu0 %v160
  %v162 = vpop.xlane.xlu0 %161
  %v163 = vmul.f32 %v162, %v135
  %v164 = vadd.f32 %v163, 1e-05
  %v165 = vrsqrt.pop %v164
  %v166 = vmul.f32 %v154, %v165
  %v167 = vsel %vm56, %v145, %v166
  %v169 = vlaneseq
  %v170 = vshrl.u32 %v169, 7
  %v171 = vsub.s32 0, %v170
  %v172 = vrot.slane %v130, %v171
  %v174 = vmul.f32 %v167, %v172
  %v176 = vlaneseq
  %v177 = vshrl.u32 %v176, 7
  %v178 = vsub.s32 0, %v177
  %v179 = vrot.slane %v131, %v178
  %v181 = vadd.f32 %v174, %v179
  %vm182 = vcmp.ge.f32.partialorder %v181, 0.0
  %v183 = vmul.f32 %v181, 0.01
  %v184 = vsel %vm182, %v181, %v183
  %v185 = vld [vmem:[%s5] sm:$0xff]
  %v186 = vld [vmem:[%s5 + $0x8] sm:$0xff]
  %v187 = vld [vmem:[%s5 + $0x10] sm:$0xff]
  %v188 = vld [vmem:[%s5 + $0x18] sm:$0xff]
  %v189 = vld [vmem:[%s5 + $0x20] sm:$0xff]
  %v190 = vld [vmem:[%s5 + $0x28] sm:$0xff]
  %v191 = vld [vmem:[%s5 + $0x30] sm:$0xff]
  %v192 = vld [vmem:[%s5 + $0x38] sm:$0xff]
  %v193 = vld [vmem:[%s6] sm:$0x1]
  %v195 = vlaneseq
  %v196 = vshrl.u32 %v195, 7
  %v197 = vsub.s32 0, %v196
  %v198 = vrot.slane %v193, %v197
  %vm200 = vcmask 523264
  %v202 = vsel %vm200, %v184, 0
  %204 = vmatprep.subr.mxu0 0.0
  %205 = vmatpush1.msra.mxu0 0.0
  %206 = vmatprep.subr.mxu0 0.0
  %207 = vmatpush1.msra.mxu0 0.0
  %208 = vmatprep.subr.mxu0 0.0
  %209 = vmatpush1.msra.mxu0 0.0
  %210 = vmatprep.subr.mxu0 0.0
  %211 = vmatpush1.msra.mxu0 0.0
  %212 = vmatprep.subr.mxu0 0.0
  %213 = vmatpush1.msra.mxu0 0.0
  %214 = vmatprep.subr.mxu0 0.0
  %215 = vmatpush1.msra.mxu0 0.0
  %216 = vmatprep.subr.mxu0 0.0
  %217 = vmatpush1.msra.mxu0 0.0
  %218 = vmatprep.subr.mxu0 0.0
  %219 = vmatpush1.msra.mxu0 0.0
  %220 = vmatprep.subr.mxu0 0.0
  %221 = vmatpush1.msra.mxu0 %v192
  %222 = vmatprep.subr.mxu0 0.0
  %223 = vmatpush1.msra.mxu0 %v191
  %224 = vmatprep.subr.mxu0 0.0
  %225 = vmatpush1.msra.mxu0 %v190
  %226 = vmatprep.subr.mxu0 0.0
  %227 = vmatpush1.msra.mxu0 %v189
  %228 = vmatprep.subr.mxu0 0.0
  %229 = vmatpush1.msra.mxu0 %v188
  %230 = vmatprep.subr.mxu0 0.0
  %231 = vmatpush1.msra.mxu0 %v187
  %232 = vmatprep.subr.mxu0 0.0
  %233 = vmatpush1.msra.mxu0 %v186
  %234 = vmatprep.subr.mxu0 0.0
  %235 = vmatpush1.msra.mxu0 %v185
  %236 = vmatprep.subr.mxu0 0.0
  %237 = vmatpush2.msra.mxu0 0.0
  %238 = vmatprep.subr.mxu0 0.0
  %239 = vmatpush2.msra.mxu0 0.0
  %240 = vmatprep.subr.mxu0 0.0
  %241 = vmatpush2.msra.mxu0 0.0
  %242 = vmatprep.subr.mxu0 0.0
  %243 = vmatpush2.msra.mxu0 0.0
  %244 = vmatprep.subr.mxu0 0.0
  %245 = vmatpush2.msra.mxu0 0.0
  %246 = vmatprep.subr.mxu0 0.0
  %247 = vmatpush2.msra.mxu0 0.0
  %248 = vmatprep.subr.mxu0 0.0
  %249 = vmatpush2.msra.mxu0 0.0
  %250 = vmatprep.subr.mxu0 0.0
  %251 = vmatpush2.msra.mxu0 0.0
  %252 = vmatprep.subr.mxu0 0.0
  %253 = vmatpush2.msra.mxu0 0.0
  %254 = vmatprep.subr.mxu0 0.0
  %255 = vmatpush2.msra.mxu0 0.0
  %256 = vmatprep.subr.mxu0 0.0
  %257 = vmatpush2.msra.mxu0 0.0
  %258 = vmatprep.subr.mxu0 0.0
  %259 = vmatpush2.msra.mxu0 0.0
  %260 = vmatprep.subr.mxu0 0.0
  %261 = vmatpush2.msra.mxu0 0.0
  %262 = vmatprep.subr.mxu0 0.0
  %263 = vmatpush2.msra.mxu0 0.0
  %264 = vmatprep.subr.mxu0 0.0
  %265 = vmatpush2.msra.mxu0 0.0
  %266 = vmatprep.subr.mxu0 0.0
  %267 = vmatpush2.msra.mxu0 0.0
  %268 = vmatprep.mubr.f32.mxu0 0.0
  %269 = vmatmul.mubr.f32.gmra.mxu0 %v202
  %v270 = vpop.f32.mrf.mxu0
  %v271 = vadd.f32 %v198, %v270
  %v272 = vpop.f32.mrf.mxu0
  %273 = vdwg.mxu0
  %v274 = vld [vmem:[%s7] sm:$0x1]
  %v275 = vld [vmem:[%s8] sm:$0x1]
  %v276 = vsel %vm56, %v271, 0.0
  %277 = vadd.xlane.f32.xlu0 %v276
  %v278 = vpop.xlane.xlu0 %277
  %v279 = vmul.f32 %v278, %v135
  %v280 = vsub.f32 %v271, %v279
  %v281 = vmul.f32 %v280, %v280
  %v282 = vsel %vm56, %v281, 0.0
  %283 = vadd.xlane.f32.xlu0 %v282
  %v284 = vpop.xlane.xlu0 %283
  %v285 = vmul.f32 %v284, %v135
  %v286 = vadd.f32 %v285, 1e-05
  %v287 = vrsqrt.pop %v286
  %v288 = vmul.f32 %v280, %v287
  %290 = vrot.lane.b32.xlu0 %v271, 96
  %v291 = vpop.permute.xlu0 %290
  %v293 = vsel %vm56, %v291, 0.0
  %294 = vadd.xlane.f32.xlu0 %v293
  %v295 = vpop.xlane.xlu0 %294
  %v296 = vmul.f32 %v295, %v135
  %v297 = vsub.f32 %v271, %v296
  %v298 = vmul.f32 %v297, %v297
  %300 = vrot.lane.b32.xlu0 %v298, 96
  %v301 = vpop.permute.xlu0 %300
  %v303 = vsel %vm56, %v301, 0.0
  %304 = vadd.xlane.f32.xlu0 %v303
  %v305 = vpop.xlane.xlu0 %304
  %v306 = vmul.f32 %v305, %v135
  %v307 = vadd.f32 %v306, 1e-05
  %v308 = vrsqrt.pop %v307
  %v309 = vmul.f32 %v297, %v308
  %v310 = vsel %vm56, %v288, %v309
  %v312 = vlaneseq
  %v313 = vshrl.u32 %v312, 7
  %v314 = vsub.s32 0, %v313
  %v315 = vrot.slane %v274, %v314
  %v317 = vmul.f32 %v310, %v315
  %v319 = vlaneseq
  %v320 = vshrl.u32 %v319, 7
  %v321 = vsub.s32 0, %v320
  %v322 = vrot.slane %v275, %v321
  %v324 = vadd.f32 %v317, %v322
  %vm325 = vcmp.ge.f32.partialorder %v324, 0.0
  %v326 = vmul.f32 %v324, 0.01
  %v327 = vsel %vm325, %v324, %v326
  %v328 = vld [vmem:[%s9] sm:$0xff]
  %v329 = vld [vmem:[%s9 + $0x8] sm:$0xff]
  %v330 = vld [vmem:[%s9 + $0x10] sm:$0xff]
  %v331 = vld [vmem:[%s9 + $0x18] sm:$0xff]
  %v332 = vld [vmem:[%s9 + $0x20] sm:$0xff]
  %v333 = vld [vmem:[%s9 + $0x28] sm:$0xff]
  %v334 = vld [vmem:[%s9 + $0x30] sm:$0xff]
  %v335 = vld [vmem:[%s9 + $0x38] sm:$0xff]
  %v336 = vld [vmem:[%s10] sm:$0x1]
  %v338 = vlaneseq
  %v339 = vshrl.u32 %v338, 7
  %v340 = vsub.s32 0, %v339
  %v341 = vrot.slane %v336, %v340
  %v344 = vsel %vm200, %v327, 0
  %346 = vmatprep.subr.mxu0 0.0
  %347 = vmatpush1.msra.mxu0 0.0
  %348 = vmatprep.subr.mxu0 0.0
  %349 = vmatpush1.msra.mxu0 0.0
  %350 = vmatprep.subr.mxu0 0.0
  %351 = vmatpush1.msra.mxu0 0.0
  %352 = vmatprep.subr.mxu0 0.0
  %353 = vmatpush1.msra.mxu0 0.0
  %354 = vmatprep.subr.mxu0 0.0
  %355 = vmatpush1.msra.mxu0 0.0
  %356 = vmatprep.subr.mxu0 0.0
  %357 = vmatpush1.msra.mxu0 0.0
  %358 = vmatprep.subr.mxu0 0.0
  %359 = vmatpush1.msra.mxu0 0.0
  %360 = vmatprep.subr.mxu0 0.0
  %361 = vmatpush1.msra.mxu0 0.0
  %362 = vmatprep.subr.mxu0 0.0
  %363 = vmatpush1.msra.mxu0 %v335
  %364 = vmatprep.subr.mxu0 0.0
  %365 = vmatpush1.msra.mxu0 %v334
  %366 = vmatprep.subr.mxu0 0.0
  %367 = vmatpush1.msra.mxu0 %v333
  %368 = vmatprep.subr.mxu0 0.0
  %369 = vmatpush1.msra.mxu0 %v332
  %370 = vmatprep.subr.mxu0 0.0
  %371 = vmatpush1.msra.mxu0 %v331
  %372 = vmatprep.subr.mxu0 0.0
  %373 = vmatpush1.msra.mxu0 %v330
  %374 = vmatprep.subr.mxu0 0.0
  %375 = vmatpush1.msra.mxu0 %v329
  %376 = vmatprep.subr.mxu0 0.0
  %377 = vmatpush1.msra.mxu0 %v328
  %378 = vmatprep.subr.mxu0 0.0
  %379 = vmatpush2.msra.mxu0 0.0
  %380 = vmatprep.subr.mxu0 0.0
  %381 = vmatpush2.msra.mxu0 0.0
  %382 = vmatprep.subr.mxu0 0.0
  %383 = vmatpush2.msra.mxu0 0.0
  %384 = vmatprep.subr.mxu0 0.0
  %385 = vmatpush2.msra.mxu0 0.0
  %386 = vmatprep.subr.mxu0 0.0
  %387 = vmatpush2.msra.mxu0 0.0
  %388 = vmatprep.subr.mxu0 0.0
  %389 = vmatpush2.msra.mxu0 0.0
  %390 = vmatprep.subr.mxu0 0.0
  %391 = vmatpush2.msra.mxu0 0.0
  %392 = vmatprep.subr.mxu0 0.0
  %393 = vmatpush2.msra.mxu0 0.0
  %394 = vmatprep.subr.mxu0 0.0
  %395 = vmatpush2.msra.mxu0 0.0
  %396 = vmatprep.subr.mxu0 0.0
  %397 = vmatpush2.msra.mxu0 0.0
  %398 = vmatprep.subr.mxu0 0.0
  %399 = vmatpush2.msra.mxu0 0.0
  %400 = vmatprep.subr.mxu0 0.0
  %401 = vmatpush2.msra.mxu0 0.0
  %402 = vmatprep.subr.mxu0 0.0
  %403 = vmatpush2.msra.mxu0 0.0
  %404 = vmatprep.subr.mxu0 0.0
  %405 = vmatpush2.msra.mxu0 0.0
  %406 = vmatprep.subr.mxu0 0.0
  %407 = vmatpush2.msra.mxu0 0.0
  %408 = vmatprep.subr.mxu0 0.0
  %409 = vmatpush2.msra.mxu0 0.0
  %410 = vmatprep.mubr.f32.mxu0 0.0
  %411 = vmatmul.mubr.f32.gmra.mxu0 %v344
  %v412 = vpop.f32.mrf.mxu0
  %v413 = vadd.f32 %v341, %v412
  %v414 = vpop.f32.mrf.mxu0
  %415 = vdwg.mxu0
  %v416 = vld [vmem:[%s11] sm:$0x1]
  %v417 = vld [vmem:[%s12] sm:$0x1]
  %vm418 = vcmask 130048
  %v419 = vsel %vm418, %v413, 0.0
  %420 = vadd.xlane.f32.xlu0 %v419
  %v421 = vpop.xlane.xlu0 %420
  %v422 = vrcp.pop 16.0
  %v423 = vmul.f32 %v421, %v422
  %v424 = vsub.f32 %v413, %v423
  %v425 = vmul.f32 %v424, %v424
  %v426 = vsel %vm418, %v425, 0.0
  %427 = vadd.xlane.f32.xlu0 %v426
  %v428 = vpop.xlane.xlu0 %427
  %v429 = vmul.f32 %v428, %v422
  %v430 = vadd.f32 %v429, 1e-05
  %v431 = vrsqrt.pop %v430
  %v432 = vmul.f32 %v424, %v431
  %434 = vrot.lane.b32.xlu0 %v413, 112
  %v435 = vpop.permute.xlu0 %434
  %v437 = vsel %vm418, %v435, 0.0
  %438 = vadd.xlane.f32.xlu0 %v437
  %v439 = vpop.xlane.xlu0 %438
  %v440 = vmul.f32 %v439, %v422
  %v441 = vsub.f32 %v413, %v440
  %v442 = vmul.f32 %v441, %v441
  %444 = vrot.lane.b32.xlu0 %v442, 112
  %v445 = vpop.permute.xlu0 %444
  %v447 = vsel %vm418, %v445, 0.0
  %448 = vadd.xlane.f32.xlu0 %v447
  %v449 = vpop.xlane.xlu0 %448
  %v450 = vmul.f32 %v449, %v422
  %v451 = vadd.f32 %v450, 1e-05
  %v452 = vrsqrt.pop %v451
  %v453 = vmul.f32 %v441, %v452
  %v454 = vsel %vm418, %v432, %v453
  %v456 = vlaneseq
  %v457 = vshrl.u32 %v456, 7
  %v458 = vsub.s32 0, %v457
  %v459 = vrot.slane %v416, %v458
  %v461 = vmul.f32 %v454, %v459
  %v463 = vlaneseq
  %v464 = vshrl.u32 %v463, 7
  %v465 = vsub.s32 0, %v464
  %v466 = vrot.slane %v417, %v465
  %v468 = vadd.f32 %v461, %v466
  %vm469 = vcmp.ge.f32.partialorder %v468, 0.0
  %v470 = vmul.f32 %v468, 0.01
  %v471 = vsel %vm469, %v468, %v470
  %472 = vst.msk [vmem:[%s13] sm:$0xff] %vm56, %v471
  // Predicated region
  $region54: #{custom_network_forward.1} parent=0 // pred_check
    _
  $region55: #{custom_network_forward.1} parent=0 // pred_check_branch
    %474 = sbr.rel (0) target = $region57
  $region56: #{custom_network_forward.1} parent=0 // pred_region
    _
  $region57: #{custom_network_forward.1} parent=0 // pred_fallthru
    _
  // Predicated region
  $region58: #{custom_network_forward.1} parent=0 // pred_check
    _
  $region59: #{custom_network_forward.1} parent=0 // pred_check_branch
    %476 = sbr.rel (0) target = $region61
  $region60: #{custom_network_forward.1} parent=0 // pred_region
    _
  $region61: #{custom_network_forward.1} parent=0 // pred_fallthru
    _

</llo_original>
